<compile_context>
chip_gen: v7x
topology: tpu7x:2x2x1
jax: 0.10.0
libtpu: 0.0.40
codegen_flags: <defaults>
</compile_context>

<pallas_src>
import math
import jax
import jax.numpy as jnp
from jax.experimental import pallas as pl
from jax.experimental.pallas import tpu as pltpu


def _round_up(n, m):
    return ((n + m - 1) // m) * m


def _critic_mlp_kernel(f_ref, w1_ref, b1_ref, w2_ref, b2_ref, w3_ref, b3_ref,
                       out_ref):
    # ---- Layer 1: concat(x, u) @ W1^T + b1 (single bf16 MXU dot) ------------
    h = jnp.dot(f_ref[...], w1_ref[...], preferred_element_type=jnp.float32)
    h = jnp.maximum(h + b1_ref[...], 0.0)                      # (TB, H) f32

    # ---- Layer 2 -------------------------------------------------------------
    h = jnp.dot(h.astype(jnp.bfloat16), w2_ref[...],
                preferred_element_type=jnp.float32)
    h = jnp.maximum(h + b2_ref[...], 0.0)                      # (TB, H) f32

    # ---- Layer 3: single output column via VPU mul + cross-lane (XLU) reduce.
    # Avoids a 128-lane zero-padded MXU pass; yields (TB, 1) directly.
    out = jnp.sum(h * w3_ref[...], axis=-1, keepdims=True) + b3_ref[...]
    out_ref[...] = out.astype(out_ref.dtype)                   # (TB, 1)


def critic_net_forward(params, x, u, *, batch_tile=1024):
    """x: (B, n_x) f32, u: (B, n_u) f32 -> (B, 1) f32."""
    w1_t, b1, w2_t, b2, w3, b3 = params
    B = x.shape[0]
    K = w1_t.shape[0]          # n_x + n_u
    H = w2_t.shape[0]

    # Concatenate once and cast to bf16 on the host side (half the input DMA).
    f = jnp.concatenate([x, u], axis=-1).astype(jnp.bfloat16)

    # Batch tile: multiple of 16 (bf16 sublane packing), big enough to amortize
    # the ~0.35us per-grid-step overhead.  If the whole batch would fit in one
    # tile, split it in two so the "parallel" axis shards across both
    # TensorCores on v7x (neutral on v5e/v6e).
    TB = min(batch_tile, _round_up(B, 16))
    if _round_up(B, TB) == TB and B > 16:
        TB = max(16, _round_up((TB + 1) // 2, 16))
    Bp = _round_up(B, TB)
    if Bp != B:
        f = jnp.pad(f, ((0, Bp - B), (0, 0)))

    grid = (Bp // TB,)

    out = pl.pallas_call(
        _critic_mlp_kernel,
        out_shape=jax.ShapeDtypeStruct((Bp, 1), jnp.float32),
        grid_spec=pltpu.PrefetchScalarGridSpec(
            num_scalar_prefetch=0,
            grid=grid,
            in_specs=[
                pl.BlockSpec((TB, K), lambda i: (i, 0)),   # f tile  (streams)
                pl.BlockSpec((K, H), lambda i: (0, 0)),    # W1^T    (resident)
                pl.BlockSpec((1, H), lambda i: (0, 0)),    # b1      (resident)
                pl.BlockSpec((H, H), lambda i: (0, 0)),    # W2^T    (resident)
                pl.BlockSpec((1, H), lambda i: (0, 0)),    # b2      (resident)
                pl.BlockSpec((1, H), lambda i: (0, 0)),    # w3 row  (resident)
                pl.BlockSpec((1, 1), lambda i: (0, 0)),    # b3      (resident)
            ],
            out_specs=pl.BlockSpec((TB, 1), lambda i: (i, 0)),
        ),
        compiler_params=pltpu.CompilerParams(
            dimension_semantics=("parallel",),             # megacore on v7x
        ),
    )(f, w1_t, b1, w2_t, b2, w3, b3)

    return out[:B]


def init_critic_params(key, n_x, n_u, n_hidden=256):
    """PyTorch nn.Linear default init; weights converted ONCE to kernel layout
    (pre-transposed, bf16 for MXU layers, f32 row vector for layer 3)."""
    def linear_init(k, fan_in, fan_out):
        kw, kb = jax.random.split(k)
        bound = math.sqrt(1.0 / fan_in)    # kaiming_uniform(a=sqrt(5)) bound
        w = jax.random.uniform(kw, (fan_out, fan_in), jnp.float32, -bound, bound)
        b = jax.random.uniform(kb, (fan_out,), jnp.float32, -bound, bound)
        return w, b

    k1, k2, k3 = jax.random.split(key, 3)
    W1, b1 = linear_init(k1, n_x + n_u, n_hidden)
    W2, b2 = linear_init(k2, n_hidden, n_hidden)
    W3, b3 = linear_init(k3, n_hidden, 1)

    w1_t = jnp.asarray(W1.T, jnp.bfloat16)            # (n_x+n_u, H)
    w2_t = jnp.asarray(W2.T, jnp.bfloat16)            # (H, H)
    w3 = jnp.asarray(W3, jnp.float32)                 # (1, H) kept f32 (VPU path)
    b3_s = jnp.asarray(b3, jnp.float32).reshape(1, 1)

    return (w1_t, b1.reshape(1, -1), w2_t, b2.reshape(1, -1), w3, b3_s)


def reference_forward(params, x, u):
    """Plain-JAX reference with the same bf16-operand / f32-accumulate numerics."""
    w1_t, b1, w2_t, b2, w3, b3 = params
    f = jnp.concatenate([x, u], axis=-1).astype(jnp.bfloat16)
    h = jnp.maximum(jnp.dot(f, w1_t, preferred_element_type=jnp.float32) + b1, 0.0)
    h = jnp.maximum(jnp.dot(h.astype(jnp.bfloat16), w2_t,
                            preferred_element_type=jnp.float32) + b2, 0.0)
    return jnp.sum(h * w3, axis=-1, keepdims=True) + b3


if __name__ == "__main__":
    key = jax.random.PRNGKey(0)
    k_p, k_x, k_u = jax.random.split(key, 3)

    B, n_x, n_u, n_hidden = 64, 8, 4, 256

    params = init_critic_params(k_p, n_x, n_u, n_hidden)
    x = jax.random.normal(k_x, (B, n_x), jnp.float32)
    u = jax.random.normal(k_u, (B, n_u), jnp.float32)

    out = critic_net_forward(params, x, u)
    out = jax.block_until_ready(out)

    ref = reference_forward(params, x, u)
    assert out.shape == (B, 1), f"bad output shape {out.shape}"
    assert jnp.allclose(out, ref, atol=2e-3, rtol=2e-3), "mismatch vs reference"

    print("KERNEL_OK")
</pallas_src>

<mosaic_0001>
module attributes {stable_mosaic.version = 11 : i64} {
  func.func @_critic_mlp_kernel(%arg0: i32, %arg1: memref<32x12xbf16, #tpu.memory_space<vmem>>, %arg2: memref<12x256xbf16, #tpu.memory_space<vmem>>, %arg3: memref<1x256xf32, #tpu.memory_space<vmem>>, %arg4: memref<256x256xbf16, #tpu.memory_space<vmem>>, %arg5: memref<1x256xf32, #tpu.memory_space<vmem>>, %arg6: memref<1x256xf32, #tpu.memory_space<vmem>>, %arg7: memref<1x1xf32, #tpu.memory_space<vmem>>, %arg8: memref<32x1xf32, #tpu.memory_space<vmem>>) attributes {dimension_semantics = [#tpu.dimension_semantics<parallel>], iteration_bounds = array<i64: 2>, scalar_prefetch = 0 : i64, scratch_operands = 0 : i64, tpu.core_type = #tpu.core_type<tc>, window_params = [{transform_indices = @transform_0, window_bounds = array<i64: 32, 12>}, {pipeline_mode = #tpu.pipeline_mode<synchronous>, transform_indices = @transform_1, window_bounds = array<i64: 12, 256>}, {pipeline_mode = #tpu.pipeline_mode<synchronous>, transform_indices = @transform_2, window_bounds = array<i64: 1, 256>}, {pipeline_mode = #tpu.pipeline_mode<synchronous>, transform_indices = @transform_3, window_bounds = array<i64: 256, 256>}, {pipeline_mode = #tpu.pipeline_mode<synchronous>, transform_indices = @transform_4, window_bounds = array<i64: 1, 256>}, {pipeline_mode = #tpu.pipeline_mode<synchronous>, transform_indices = @transform_5, window_bounds = array<i64: 1, 256>}, {pipeline_mode = #tpu.pipeline_mode<synchronous>, transform_indices = @transform_6, window_bounds = array<i64: 1, 1>}, {transform_indices = @transform_7, window_bounds = array<i64: 32, 1>}]} {
    %c0 = arith.constant 0 : index
    %c0_0 = arith.constant 0 : index
    %0 = vector.load %arg1[%c0, %c0_0] : memref<32x12xbf16, #tpu.memory_space<vmem>>, vector<32x12xbf16>
    %c0_1 = arith.constant 0 : index
    %c0_2 = arith.constant 0 : index
    %1 = vector.load %arg2[%c0_1, %c0_2] : memref<12x256xbf16, #tpu.memory_space<vmem>>, vector<12x256xbf16>
    %cst = arith.constant dense<0.000000e+00> : vector<32x256xf32>
    %2 = tpu.matmul %0, %1, %cst {dimension_numbers = #tpu.dot_dimension_numbers<[1], [0], [0], [1], [0, 0, 1, 1], [], []>} : vector<32x12xbf16>, vector<12x256xbf16>, vector<32x256xf32> -> vector<32x256xf32>
    %c0_3 = arith.constant 0 : index
    %c0_4 = arith.constant 0 : index
    %3 = vector.load %arg3[%c0_3, %c0_4] : memref<1x256xf32, #tpu.memory_space<vmem>>, vector<1x256xf32>
    %4 = vector.broadcast %3 : vector<1x256xf32> to vector<32x256xf32>
    %5 = arith.addf %2, %4 : vector<32x256xf32>
    %cst_5 = arith.constant 0.000000e+00 : f32
    %6 = vector.broadcast %cst_5 : f32 to vector<32x256xf32>
    %7 = arith.maximumf %5, %6 : vector<32x256xf32>
    %8 = arith.truncf %7 : vector<32x256xf32> to vector<32x256xbf16>
    %c0_6 = arith.constant 0 : index
    %c0_7 = arith.constant 0 : index
    %9 = vector.load %arg4[%c0_6, %c0_7] : memref<256x256xbf16, #tpu.memory_space<vmem>>, vector<256x256xbf16>
    %cst_8 = arith.constant dense<0.000000e+00> : vector<32x256xf32>
    %10 = tpu.matmul %8, %9, %cst_8 {dimension_numbers = #tpu.dot_dimension_numbers<[1], [0], [0], [1], [0, 0, 1, 1], [], []>} : vector<32x256xbf16>, vector<256x256xbf16>, vector<32x256xf32> -> vector<32x256xf32>
    %c0_9 = arith.constant 0 : index
    %c0_10 = arith.constant 0 : index
    %11 = vector.load %arg5[%c0_9, %c0_10] : memref<1x256xf32, #tpu.memory_space<vmem>>, vector<1x256xf32>
    %12 = vector.broadcast %11 : vector<1x256xf32> to vector<32x256xf32>
    %13 = arith.addf %10, %12 : vector<32x256xf32>
    %cst_11 = arith.constant 0.000000e+00 : f32
    %14 = vector.broadcast %cst_11 : f32 to vector<32x256xf32>
    %15 = arith.maximumf %13, %14 : vector<32x256xf32>
    %c0_12 = arith.constant 0 : index
    %c0_13 = arith.constant 0 : index
    %16 = vector.load %arg6[%c0_12, %c0_13] : memref<1x256xf32, #tpu.memory_space<vmem>>, vector<1x256xf32>
    %17 = vector.broadcast %16 : vector<1x256xf32> to vector<32x256xf32>
    %18 = arith.mulf %15, %17 : vector<32x256xf32>
    %cst_14 = arith.constant dense<0.000000e+00> : vector<32xf32>
    %19 = vector.multi_reduction <add>, %18, %cst_14 [1] : vector<32x256xf32> to vector<32xf32>
    %20 = vector.shape_cast %19 : vector<32xf32> to vector<32x1xf32>
    %c0_15 = arith.constant 0 : index
    %c0_16 = arith.constant 0 : index
    %21 = vector.load %arg7[%c0_15, %c0_16] : memref<1x1xf32, #tpu.memory_space<vmem>>, vector<1x1xf32>
    %22 = vector.broadcast %21 : vector<1x1xf32> to vector<32x1xf32>
    %23 = arith.addf %20, %22 : vector<32x1xf32>
    %c0_17 = arith.constant 0 : index
    %c0_18 = arith.constant 0 : index
    %24 = vector.load %arg8[%c0_17, %c0_18] : memref<32x1xf32, #tpu.memory_space<vmem>>, vector<32x1xf32>
    tpu.vector_store %arg8[%c0_17, %c0_18], %23 {strides = array<i32>} : memref<32x1xf32, #tpu.memory_space<vmem>>, vector<32x1xf32>,
    return
  }
  func.func @transform_0(%arg0: i32) -> (i32, i32) {
    %c0_i32 = arith.constant 0 : i32
    %c0_i32_0 = arith.constant 0 : i32
    return %arg0, %c0_i32 : i32, i32
  }
  func.func @transform_1(%arg0: i32) -> (i32, i32) {
    %c0_i32 = arith.constant 0 : i32
    %c0_i32_0 = arith.constant 0 : i32
    %c0_i32_1 = arith.constant 0 : i32
    return %c0_i32, %c0_i32_0 : i32, i32
  }
  func.func @transform_2(%arg0: i32) -> (i32, i32) {
    %c0_i32 = arith.constant 0 : i32
    %c0_i32_0 = arith.constant 0 : i32
    %c0_i32_1 = arith.constant 0 : i32
    return %c0_i32, %c0_i32_0 : i32, i32
  }
  func.func @transform_3(%arg0: i32) -> (i32, i32) {
    %c0_i32 = arith.constant 0 : i32
    %c0_i32_0 = arith.constant 0 : i32
    %c0_i32_1 = arith.constant 0 : i32
    return %c0_i32, %c0_i32_0 : i32, i32
  }
  func.func @transform_4(%arg0: i32) -> (i32, i32) {
    %c0_i32 = arith.constant 0 : i32
    %c0_i32_0 = arith.constant 0 : i32
    %c0_i32_1 = arith.constant 0 : i32
    return %c0_i32, %c0_i32_0 : i32, i32
  }
  func.func @transform_5(%arg0: i32) -> (i32, i32) {
    %c0_i32 = arith.constant 0 : i32
    %c0_i32_0 = arith.constant 0 : i32
    %c0_i32_1 = arith.constant 0 : i32
    return %c0_i32, %c0_i32_0 : i32, i32
  }
  func.func @transform_6(%arg0: i32) -> (i32, i32) {
    %c0_i32 = arith.constant 0 : i32
    %c0_i32_0 = arith.constant 0 : i32
    %c0_i32_1 = arith.constant 0 : i32
    return %c0_i32, %c0_i32_0 : i32, i32
  }
  func.func @transform_7(%arg0: i32) -> (i32, i32) {
    %c0_i32 = arith.constant 0 : i32
    %c0_i32_0 = arith.constant 0 : i32
    return %arg0, %c0_i32 : i32, i32
  }
}

</mosaic_0001>

<llo_original>
// kernel: tpu_custom_call.1
$region0: #{tpu_custom_call.1}
  #allocation0 [shape = 'u32[]', space=smem, size = 0x4, offset = 0x4, fixed_abs, tag = 'smem constant byte address 0x4 - core index']
  #allocation1 [shape = 'u32[144,128]{1,0:T(1,128)}', space=vmem, size = 0x12000, scoped, tag = 'internal scratch']
  #allocation2 [shape = 'f32[1,1]{1,0:T(1,128)S(1)}', space=vmem, size = 0x200, scoped, tag = 'scoped memory for tpu_custom_call.1']
  %s0 = inlined_call_operand.vmem [shape: bf16[64,12], index: 0, kind: input, shape index: {}]
  %s1 = inlined_call_operand.vmem [shape: bf16[12,256], index: 1, kind: input, shape index: {}]
  %s2 = inlined_call_operand.vmem [shape: f32[1,256], index: 2, kind: input, shape index: {}]
  %s3 = inlined_call_operand.hbm [shape: bf16[256,256], index: 3, kind: input, shape index: {}]
  %s4 = inlined_call_operand.vmem [shape: f32[1,256], index: 4, kind: input, shape index: {}]
  %s5 = inlined_call_operand.vmem [shape: f32[1,256], index: 5, kind: input, shape index: {}]
  %s6 = inlined_call_operand.<no memory space> [shape: f32[1,1], index: 6, kind: input, shape index: {}]
  %s7 = inlined_call_operand.vmem [shape: f32[64,1], index: 7, kind: output, shape index: {}]
  %s8 = sld [smem:[#allocation0]]
  $region65: #{tpu_custom_call.1} parent=0
    _
  %s10 = ssub.s32 1, %s8
  %s11 = scalar_select 0, %s10, %s8
  %v12 = vstv %s6
  %13 = vst [vmem:[#allocation2] sm:$0x1] %v12
  $region1: #{tpu_custom_call.1} parent=0
    #allocation3 [shape = 'u8[131072]{0}', space=vmem, size = 0x20000, scoped, tag = 'input window, operand 3, single buffered']
    #allocation4 [shape = 's32[2]{0}', space=sflag, size = 0x8, scoped, tag = 'scoped memory for tpu_custom_call.1']
    %14 = vsyncpa [#allocation4], 0
    loop: start=0, step=1, limit=4
    $region2: #{tpu_custom_call.1} parent=1 // loop_pre_header
      _
    $region3: #{tpu_custom_call.1} parent=1 // loop_header
      %s16 = sphi 0, %s20
      %p17 = scmp.ge.s32.totalorder %s16, 4
      %s26 = sphi 0, %s28
      %s29 = sphi 0, %s26
      %s30 = sphi 0, %s29
      %s46 = sphi 0, %s30
      %s50 = sphi 0, %s50
      %s52 = sphi 0, %s50
      %s53 = sphi 0, %s52
      %s67 = sphi 0, %s53
      %s71 = sphi 0, %s71
      %s73 = sphi 0, %s71
      %s74 = sphi 0, %s73
      %s88 = sphi 0, %s74
      %s92 = sphi 0, %s92
      %s94 = sphi 0, %s92
      %s95 = sphi 0, %s94
      %s109 = sphi 0, %s95
      %s113 = sphi 0, %s113
      %s115 = sphi 0, %s113
      %s116 = sphi 0, %s115
      %s130 = sphi 0, %s116
      %s134 = sphi 0, %s134
      %s136 = sphi 0, %s134
      %s137 = sphi 0, %s136
      %s151 = sphi 0, %s137
      %s155 = sphi 0, %s155
      %s157 = sphi 0, %s155
      %s158 = sphi 0, %s157
      %s172 = sphi 0, %s158
      %s178 = sphi 0, %s180
      %s181 = sphi 0, %s178
      %s182 = sphi 0, %s181
      %s198 = sphi 0, %s182
    $region4: #{tpu_custom_call.1} parent=1 // loop_header_branch
      %19 = sbr.rel (%p17) target = $region8
    $region5: #{tpu_custom_call.1} parent=1 // loop_body
      %s21 = ssub.s32 %s16, 1
      %s22 = ssub.s32 %s16, 2
      %s23 = sadd.s32 %s16, 1
      %s24 = ssub.s32 %s16, %s23
      %p25 = scmp.eq.s32.totalorder %s24, 0
      %s27 = sadd.s32 %s26, 1
      %s28 = scalar_select %p25, %s26, %s27
      %p31 = pneg %p25
      %p32 = scmp.eq.s32.totalorder %s16, 1
      %p33 = por %p31, %p32
      %p34 = scmp.ne.s32.totalorder %s26, %s29
      %p35 = scmp.eq.s32.totalorder %s16, 0
      %p36 = por %p34, %p35
      %p37 = scmp.ne.s32.totalorder %s26, %s29
      %p38 = scmp.eq.s32.totalorder %s21, 1
      %p39 = por %p37, %p38
      %p40 = scmp.ne.s32.totalorder %s29, %s30
      %p41 = scmp.eq.s32.totalorder %s21, 0
      %p42 = por %p40, %p41
      %p43 = scmp.ne.s32.totalorder %s29, %s30
      %p44 = scmp.eq.s32.totalorder %s22, 1
      %p45 = por %p43, %p44
      %p47 = scmp.ne.s32.totalorder %s30, %s46
      %p48 = scmp.eq.s32.totalorder %s22, 0
      %p49 = por %p47, %p48
      %s51 = sadd.s32 %s50, 1
      %p54 = scmp.eq.s32.totalorder %s16, 1
      %p55 = scmp.ne.s32.totalorder %s50, %s52
      %p56 = scmp.eq.s32.totalorder %s16, 0
      %p57 = por %p55, %p56
      %p58 = scmp.ne.s32.totalorder %s50, %s52
      %p59 = scmp.eq.s32.totalorder %s21, 1
      %p60 = por %p58, %p59
      %p61 = scmp.ne.s32.totalorder %s52, %s53
      %p62 = scmp.eq.s32.totalorder %s21, 0
      %p63 = por %p61, %p62
      %p64 = scmp.ne.s32.totalorder %s52, %s53
      %p65 = scmp.eq.s32.totalorder %s22, 1
      %p66 = por %p64, %p65
      %p68 = scmp.ne.s32.totalorder %s53, %s67
      %p69 = scmp.eq.s32.totalorder %s22, 0
      %p70 = por %p68, %p69
      %s72 = sadd.s32 %s71, 1
      %p75 = scmp.eq.s32.totalorder %s16, 1
      %p76 = scmp.ne.s32.totalorder %s71, %s73
      %p77 = scmp.eq.s32.totalorder %s16, 0
      %p78 = por %p76, %p77
      %p79 = scmp.ne.s32.totalorder %s71, %s73
      %p80 = scmp.eq.s32.totalorder %s21, 1
      %p81 = por %p79, %p80
      %p82 = scmp.ne.s32.totalorder %s73, %s74
      %p83 = scmp.eq.s32.totalorder %s21, 0
      %p84 = por %p82, %p83
      %p85 = scmp.ne.s32.totalorder %s73, %s74
      %p86 = scmp.eq.s32.totalorder %s22, 1
      %p87 = por %p85, %p86
      %p89 = scmp.ne.s32.totalorder %s74, %s88
      %p90 = scmp.eq.s32.totalorder %s22, 0
      %p91 = por %p89, %p90
      %s93 = sadd.s32 %s92, 1
      %p96 = scmp.eq.s32.totalorder %s16, 1
      %p97 = scmp.ne.s32.totalorder %s92, %s94
      %p98 = scmp.eq.s32.totalorder %s16, 0
      %p99 = por %p97, %p98
      %p100 = scmp.ne.s32.totalorder %s92, %s94
      %p101 = scmp.eq.s32.totalorder %s21, 1
      %p102 = por %p100, %p101
      %p103 = scmp.ne.s32.totalorder %s94, %s95
      %p104 = scmp.eq.s32.totalorder %s21, 0
      %p105 = por %p103, %p104
      %p106 = scmp.ne.s32.totalorder %s94, %s95
      %p107 = scmp.eq.s32.totalorder %s22, 1
      %p108 = por %p106, %p107
      %p110 = scmp.ne.s32.totalorder %s95, %s109
      %p111 = scmp.eq.s32.totalorder %s22, 0
      %p112 = por %p110, %p111
      %s114 = sadd.s32 %s113, 1
      %p117 = scmp.eq.s32.totalorder %s16, 1
      %p118 = scmp.ne.s32.totalorder %s113, %s115
      %p119 = scmp.eq.s32.totalorder %s16, 0
      %p120 = por %p118, %p119
      %p121 = scmp.ne.s32.totalorder %s113, %s115
      %p122 = scmp.eq.s32.totalorder %s21, 1
      %p123 = por %p121, %p122
      %p124 = scmp.ne.s32.totalorder %s115, %s116
      %p125 = scmp.eq.s32.totalorder %s21, 0
      %p126 = por %p124, %p125
      %p127 = scmp.ne.s32.totalorder %s115, %s116
      %p128 = scmp.eq.s32.totalorder %s22, 1
      %p129 = por %p127, %p128
      %p131 = scmp.ne.s32.totalorder %s116, %s130
      %p132 = scmp.eq.s32.totalorder %s22, 0
      %p133 = por %p131, %p132
      %s135 = sadd.s32 %s134, 1
      %p138 = scmp.eq.s32.totalorder %s16, 1
      %p139 = scmp.ne.s32.totalorder %s134, %s136
      %p140 = scmp.eq.s32.totalorder %s16, 0
      %p141 = por %p139, %p140
      %p142 = scmp.ne.s32.totalorder %s134, %s136
      %p143 = scmp.eq.s32.totalorder %s21, 1
      %p144 = por %p142, %p143
      %p145 = scmp.ne.s32.totalorder %s136, %s137
      %p146 = scmp.eq.s32.totalorder %s21, 0
      %p147 = por %p145, %p146
      %p148 = scmp.ne.s32.totalorder %s136, %s137
      %p149 = scmp.eq.s32.totalorder %s22, 1
      %p150 = por %p148, %p149
      %p152 = scmp.ne.s32.totalorder %s137, %s151
      %p153 = scmp.eq.s32.totalorder %s22, 0
      %p154 = por %p152, %p153
      %s156 = sadd.s32 %s155, 1
      %p159 = scmp.eq.s32.totalorder %s16, 1
      %p160 = scmp.ne.s32.totalorder %s155, %s157
      %p161 = scmp.eq.s32.totalorder %s16, 0
      %p162 = por %p160, %p161
      %p163 = scmp.ne.s32.totalorder %s155, %s157
      %p164 = scmp.eq.s32.totalorder %s21, 1
      %p165 = por %p163, %p164
      %p166 = scmp.ne.s32.totalorder %s157, %s158
      %p167 = scmp.eq.s32.totalorder %s21, 0
      %p168 = por %p166, %p167
      %p169 = scmp.ne.s32.totalorder %s157, %s158
      %p170 = scmp.eq.s32.totalorder %s22, 1
      %p171 = por %p169, %p170
      %p173 = scmp.ne.s32.totalorder %s158, %s172
      %p174 = scmp.eq.s32.totalorder %s22, 0
      %p175 = por %p173, %p174
      %s176 = ssub.s32 %s16, %s23
      %p177 = scmp.eq.s32.totalorder %s176, 0
      %s179 = sadd.s32 %s178, 1
      %s180 = scalar_select %p177, %s178, %s179
      %p183 = pneg %p177
      %p184 = scmp.eq.s32.totalorder %s16, 1
      %p185 = por %p183, %p184
      %p186 = scmp.ne.s32.totalorder %s178, %s181
      %p187 = scmp.eq.s32.totalorder %s16, 0
      %p188 = por %p186, %p187
      %p189 = scmp.ne.s32.totalorder %s178, %s181
      %p190 = scmp.eq.s32.totalorder %s21, 1
      %p191 = por %p189, %p190
      %p192 = scmp.ne.s32.totalorder %s181, %s182
      %p193 = scmp.eq.s32.totalorder %s21, 0
      %p194 = por %p192, %p193
      %p195 = scmp.ne.s32.totalorder %s181, %s182
      %p196 = scmp.eq.s32.totalorder %s22, 1
      %p197 = por %p195, %p196
      %p199 = scmp.ne.s32.totalorder %s182, %s198
      %p200 = scmp.eq.s32.totalorder %s22, 0
      %p201 = por %p199, %p200
      %p202 = scmp.le.s32.totalorder 1, %s16
      %p203 = scmp.lt.s32.totalorder %s16, 3
      %p204 = pnand %p202, %p203
      %p205 = pneg %p204
      // Predicated region
      $region9: #{tpu_custom_call.1} parent=5 // pred_check
        _
      $region10: #{tpu_custom_call.1} parent=5 // pred_check_branch
        %207 = sbr.rel (%p204) target = $region12
      $region11: #{tpu_custom_call.1} parent=5 // pred_region
        %s208 = ssub.s32 %s16, 1
        // Predicated region
        $region13: #{tpu_custom_call.1} parent=11 // pred_check
          %p209 = pneg %p63
        $region14: #{tpu_custom_call.1} parent=11 // pred_check_branch
          %211 = sbr.rel (%p209) target = $region16
        $region15: #{tpu_custom_call.1} parent=11 // pred_region
          _
        $region16: #{tpu_custom_call.1} parent=11 // pred_fallthru
          _
        // Predicated region
        $region17: #{tpu_custom_call.1} parent=11 // pred_check
          %p212 = pneg %p84
        $region18: #{tpu_custom_call.1} parent=11 // pred_check_branch
          %214 = sbr.rel (%p212) target = $region20
        $region19: #{tpu_custom_call.1} parent=11 // pred_region
          _
        $region20: #{tpu_custom_call.1} parent=11 // pred_fallthru
          _
        // Predicated region
        $region21: #{tpu_custom_call.1} parent=11 // pred_check
          %p215 = pneg %p105
        $region22: #{tpu_custom_call.1} parent=11 // pred_check_branch
          %217 = sbr.rel (%p215) target = $region24
        $region23: #{tpu_custom_call.1} parent=11 // pred_region
          %s219 = ssub.s32 4096, 4096
          %220 = vsyncadd [#allocation4], %s219
          %s221 = sshll.u32 [#allocation3], 4
          %s222 = int_to_ptr.vmem [resolvable:$true] %s221
          %227 = dma.hbm_to_vmem [thread:$0]  %s3, 4096, %s222, [#allocation4], 128, 128, 8
        $region24: #{tpu_custom_call.1} parent=11 // pred_fallthru
          _
        // Predicated region
        $region25: #{tpu_custom_call.1} parent=11 // pred_check
          %p228 = pneg %p126
        $region26: #{tpu_custom_call.1} parent=11 // pred_check_branch
          %230 = sbr.rel (%p228) target = $region28
        $region27: #{tpu_custom_call.1} parent=11 // pred_region
          _
        $region28: #{tpu_custom_call.1} parent=11 // pred_fallthru
          _
        // Predicated region
        $region29: #{tpu_custom_call.1} parent=11 // pred_check
          %p231 = pneg %p147
        $region30: #{tpu_custom_call.1} parent=11 // pred_check_branch
          %233 = sbr.rel (%p231) target = $region32
        $region31: #{tpu_custom_call.1} parent=11 // pred_region
          _
        $region32: #{tpu_custom_call.1} parent=11 // pred_fallthru
          _
        // Predicated region
        $region33: #{tpu_custom_call.1} parent=11 // pred_check
          %p234 = pneg %p168
        $region34: #{tpu_custom_call.1} parent=11 // pred_check_branch
          %236 = sbr.rel (%p234) target = $region36
        $region35: #{tpu_custom_call.1} parent=11 // pred_region
          _
        $region36: #{tpu_custom_call.1} parent=11 // pred_fallthru
          _
      $region12: #{tpu_custom_call.1} parent=5 // pred_fallthru
        _
      %p237 = scmp.lt.s32.totalorder %s16, 2
      // Predicated region
      $region37: #{tpu_custom_call.1} parent=5 // pred_check
        %p238 = pneg %p237
      $region38: #{tpu_custom_call.1} parent=5 // pred_check_branch
        %240 = sbr.rel (%p238) target = $region40
      $region39: #{tpu_custom_call.1} parent=5 // pred_region
        // Predicated region
        $region41: #{tpu_custom_call.1} parent=39 // pred_check
          %p241 = pneg %p36
        $region42: #{tpu_custom_call.1} parent=39 // pred_check_branch
          %243 = sbr.rel (%p241) target = $region44
        $region43: #{tpu_custom_call.1} parent=39 // pred_region
          %s244 = smul.u32 4, %s16
          %p245 = scmp.lt.s32.totalorder %s244, 7
          %s246 = scalar_select %p245, %s244, 7
          %s247 = smul.addr %s246, 4
          %s248 = scalar_lea.vmem %s0, %s247
          %s249 = smul.u32 4, %s16
        $region44: #{tpu_custom_call.1} parent=39 // pred_fallthru
          _
      $region40: #{tpu_custom_call.1} parent=5 // pred_fallthru
        _
      %p250 = scmp.le.s32.totalorder 1, %s16
      %p251 = scmp.lt.s32.totalorder %s16, 3
      %p252 = pnand %p250, %p251
      %p253 = pneg %p252
      // Predicated region
      $region45: #{tpu_custom_call.1} parent=5 // pred_check
        _
      $region46: #{tpu_custom_call.1} parent=5 // pred_check_branch
        %255 = sbr.rel (%p252) target = $region48
      $region47: #{tpu_custom_call.1} parent=5 // pred_region
        %s256 = ssub.s32 %s16, 1
        // Predicated region
        $region49: #{tpu_custom_call.1} parent=47 // pred_check
          %p257 = pneg %p105
        $region50: #{tpu_custom_call.1} parent=47 // pred_check_branch
          %259 = sbr.rel (%p257) target = $region52
        $region51: #{tpu_custom_call.1} parent=47 // pred_region
          %260 = dma.done [#allocation4], 4096
        $region52: #{tpu_custom_call.1} parent=47 // pred_fallthru
          _
        %s261 = smul.u32 4, %s21
        %p262 = scmp.lt.s32.totalorder %s261, 7
        %s263 = scalar_select %p262, %s261, 7
        %s264 = smul.addr %s263, 4
        %s265 = scalar_lea.vmem %s0, %s264
        %p266 = pneg %p42
        %p267 = pneg %p39
        %p268 = pneg %p63
        %p269 = pneg %p60
        %p270 = pneg %p84
        %p271 = pneg %p81
        %p272 = pneg %p105
        %p273 = pneg %p102
        %p274 = pneg %p126
        %p275 = pneg %p123
        %p276 = pneg %p147
        %p277 = pneg %p144
        %p278 = pneg %p168
        %p279 = pneg %p165
        %p280 = pneg %p194
        %p281 = pneg %p191
        %s282 = smul.u32 4, %s21
        %p283 = scmp.lt.s32.totalorder %s282, 7
        %s284 = scalar_select %p283, %s282, 7
        %s285 = smul.addr %s284, 8
        %s286 = scalar_lea.vmem %s7, %s285
        %s287 = smul.u32 4, %s21
        %p288 = scmp.lt.s32.totalorder %s287, 7
        %s289 = scalar_select %p288, %s287, 7
        %s290 = smul.addr %s289, 4
        %s291 = scalar_lea.vmem %s0, %s290
        %s292 = smul.u32 4, %s21
        %s293 = smul.u32 4, %s21
        %p294 = scmp.lt.s32.totalorder %s293, 7
        %s295 = scalar_select %p294, %s293, 7
        %s296 = smul.addr %s295, 8
        %s297 = scalar_lea.vmem %s7, %s296
        %s298 = smul.u32 4, %s21
        %v300 = vld [vmem:[%s291] sm:$0xf]
        %v301 = vld [vmem:[%s291 + $0x4] sm:$0xf]
        %v302 = vld [vmem:[%s291 + $0x8] sm:$0xf]
        %v303 = vld [vmem:[%s291 + $0xc] sm:$0xf]
        %v304 = vld [vmem:[%s1] sm:$0xff]
        %v305 = vld [vmem:[%s1 + $0x8] sm:$0x33]
        %v306 = vld [vmem:[%s2] sm:$0x3]
        %v308 = vlaneseq
        %v309 = vshrl.u32 %v308, 7
        %v310 = vsub.s32 0, %v309
        %v311 = vrot.slane %v306, %v310
        %v312 = vlaneseq
        %v313 = vshrl.u32 %v312, 7
        %v314 = vsub.s32 1, %v313
        %v315 = vrot.slane %v306, %v314
        %v322 = vunpack.c.l.b16 %v300
        %v323 = vunpack.c.l.b16 %v301
        %v324 = vunpack.c.l.b16 %v302
        %v325 = vunpack.c.l.b16 %v303
        %v326 = vpack.c.b16 %v323, %v322
        %v327 = vpack.c.b16 %v325, %v324
        %v330 = vunpack.c.l.b16 %v304
        %v331 = vunpack.c.h.b16 %v304
        %v332 = vunpack.c.l.b16 %v305
        %v333 = vunpack.c.h.b16 %v305
        %v334 = vpack.c.b16 %v332, %v330
        %v335 = vpack.c.b16 %v333, %v331
        %vm336 = vcmask 97280
        %v338 = vsel %vm336, %v326, 0
        %v341 = vsel %vm336, %v327, 0
        %vm343 = vcmask 1045504
        %v345 = vsel %vm343, %v334, 0
        %v348 = vsel %vm343, %v335, 0
        %350 = vmatprep.subr.bf16.mxu0 %v348
        %351 = vmatpush1.bf16.msra.mxu0 %v345
        %352 = vmatprep.subr.bf16.mxu0 0
        %353 = vmatpush1.bf16.msra.mxu0 0
        %354 = vmatprep.subr.bf16.mxu0 0
        %355 = vmatpush1.bf16.msra.mxu0 0
        %356 = vmatprep.subr.bf16.mxu0 0
        %357 = vmatpush1.bf16.msra.mxu0 0
        %358 = vmatprep.subr.bf16.mxu0 0
        %359 = vmatpush1.bf16.msra.mxu0 0
        %360 = vmatprep.subr.bf16.mxu0 0
        %361 = vmatpush1.bf16.msra.mxu0 0
        %362 = vmatprep.subr.bf16.mxu0 0
        %363 = vmatpush1.bf16.msra.mxu0 0
        %364 = vmatprep.subr.bf16.mxu0 0
        %365 = vmatpush1.bf16.msra.mxu0 0
        %366 = vmatprep.subr.bf16.mxu0 0
        %367 = vmatpush1.bf16.msra.mxu0 0
        %368 = vmatprep.subr.bf16.mxu0 0
        %369 = vmatpush1.bf16.msra.mxu0 0
        %370 = vmatprep.subr.bf16.mxu0 0
        %371 = vmatpush1.bf16.msra.mxu0 0
        %372 = vmatprep.subr.bf16.mxu0 0
        %373 = vmatpush1.bf16.msra.mxu0 0
        %374 = vmatprep.subr.bf16.mxu0 0
        %375 = vmatpush1.bf16.msra.mxu0 0
        %376 = vmatprep.subr.bf16.mxu0 0
        %377 = vmatpush1.bf16.msra.mxu0 0
        %378 = vmatprep.subr.bf16.mxu0 0
        %379 = vmatpush1.bf16.msra.mxu0 0
        %380 = vmatprep.subr.bf16.mxu0 0
        %381 = vmatpush1.bf16.msra.mxu0 0
        %382 = vmatprep.mubr.bf16.mxu0 0
        %383 = vmatmul.mubr.bf16.gmra.mrb[0].mxu0 %v338
        %v384 = vpop.f32.mrb[0].mxu0
        %v385 = vadd.f32 %v311, %v384
        %v386 = vpop.f32.mrb[0].mxu0
        %v387 = vadd.f32 %v315, %v386
        %v388 = vpop.f32.mrb[0].mxu0
        %v389 = vadd.f32 %v311, %v388
        %v390 = vpop.f32.mrb[0].mxu0
        %v391 = vadd.f32 %v315, %v390
        %392 = vmatprep.mubr.bf16.mxu0 0
        %393 = vmatmul.mubr.bf16.gmra.mrb[0].mxu0 %v341
        %v394 = vpop.f32.mrb[0].mxu0
        %v395 = vadd.f32 %v311, %v394
        %v396 = vpop.f32.mrb[0].mxu0
        %v397 = vadd.f32 %v315, %v396
        %v398 = vpop.f32.mrb[0].mxu0
        %v399 = vadd.f32 %v311, %v398
        %v400 = vpop.f32.mrb[0].mxu0
        %v401 = vadd.f32 %v315, %v400
        %402 = vdwg.mxu0
        %v403 = vmax.f32 %v385, 0.0
        %v404 = vmax.f32 %v387, 0.0
        %v405 = vmax.f32 %v389, 0.0
        %v406 = vmax.f32 %v391, 0.0
        %v407 = vmax.f32 %v395, 0.0
        %v408 = vmax.f32 %v397, 0.0
        %v409 = vmax.f32 %v399, 0.0
        %v410 = vmax.f32 %v401, 0.0
        %v411 = vpack.c.bf16 %v405, %v403
        %v412 = vpack.c.bf16 %v406, %v404
        %v413 = vpack.c.bf16 %v409, %v407
        %v414 = vpack.c.bf16 %v410, %v408
        %v415 = vld [vmem:[#allocation3] sm:$0xff]
        %v416 = vld [vmem:[#allocation3 + $0x8] sm:$0xff]
        %v417 = vld [vmem:[#allocation3 + $0x10] sm:$0xff]
        %v418 = vld [vmem:[#allocation3 + $0x18] sm:$0xff]
        %v419 = vld [vmem:[#allocation3 + $0x20] sm:$0xff]
        %v420 = vld [vmem:[#allocation3 + $0x28] sm:$0xff]
        %v421 = vld [vmem:[#allocation3 + $0x30] sm:$0xff]
        %v422 = vld [vmem:[#allocation3 + $0x38] sm:$0xff]
        %v423 = vld [vmem:[#allocation3 + $0x40] sm:$0xff]
        %v424 = vld [vmem:[#allocation3 + $0x48] sm:$0xff]
        %v425 = vld [vmem:[#allocation3 + $0x50] sm:$0xff]
        %v426 = vld [vmem:[#allocation3 + $0x58] sm:$0xff]
        %v427 = vld [vmem:[#allocation3 + $0x60] sm:$0xff]
        %v428 = vld [vmem:[#allocation3 + $0x68] sm:$0xff]
        %v429 = vld [vmem:[#allocation3 + $0x70] sm:$0xff]
        %v430 = vld [vmem:[#allocation3 + $0x78] sm:$0xff]
        %v431 = vld [vmem:[#allocation3 + $0x80] sm:$0xff]
        %v432 = vld [vmem:[#allocation3 + $0x88] sm:$0xff]
        %v433 = vld [vmem:[#allocation3 + $0x90] sm:$0xff]
        %v434 = vld [vmem:[#allocation3 + $0x98] sm:$0xff]
        %v435 = vld [vmem:[#allocation3 + $0xa0] sm:$0xff]
        %v436 = vld [vmem:[#allocation3 + $0xa8] sm:$0xff]
        %v437 = vld [vmem:[#allocation3 + $0xb0] sm:$0xff]
        %v438 = vld [vmem:[#allocation3 + $0xb8] sm:$0xff]
        %v439 = vld [vmem:[#allocation3 + $0xc0] sm:$0xff]
        %v440 = vld [vmem:[#allocation3 + $0xc8] sm:$0xff]
        %v441 = vld [vmem:[#allocation3 + $0xd0] sm:$0xff]
        %v442 = vld [vmem:[#allocation3 + $0xd8] sm:$0xff]
        %v443 = vld [vmem:[#allocation3 + $0xe0] sm:$0xff]
        %v444 = vld [vmem:[#allocation3 + $0xe8] sm:$0xff]
        %v445 = vld [vmem:[#allocation3 + $0xf0] sm:$0xff]
        %v446 = vld [vmem:[#allocation3 + $0xf8] sm:$0xff]
        %v447 = vld [vmem:[%s4] sm:$0x3]
        %v449 = vlaneseq
        %v450 = vshrl.u32 %v449, 7
        %v451 = vsub.s32 0, %v450
        %v452 = vrot.slane %v447, %v451
        %v453 = vlaneseq
        %v454 = vshrl.u32 %v453, 7
        %v455 = vsub.s32 1, %v454
        %v456 = vrot.slane %v447, %v455
        %v491 = vunpack.c.l.b16 %v415
        %v492 = vunpack.c.h.b16 %v415
        %v493 = vunpack.c.l.b16 %v416
        %v494 = vunpack.c.h.b16 %v416
        %v495 = vunpack.c.l.b16 %v417
        %v496 = vunpack.c.h.b16 %v417
        %v497 = vunpack.c.l.b16 %v418
        %v498 = vunpack.c.h.b16 %v418
        %v499 = vunpack.c.l.b16 %v419
        %v500 = vunpack.c.h.b16 %v419
        %v501 = vunpack.c.l.b16 %v420
        %v502 = vunpack.c.h.b16 %v420
        %v503 = vunpack.c.l.b16 %v421
        %v504 = vunpack.c.h.b16 %v421
        %v505 = vunpack.c.l.b16 %v422
        %v506 = vunpack.c.h.b16 %v422
        %v507 = vunpack.c.l.b16 %v423
        %v508 = vunpack.c.h.b16 %v423
        %v509 = vunpack.c.l.b16 %v424
        %v510 = vunpack.c.h.b16 %v424
        %v511 = vunpack.c.l.b16 %v425
        %v512 = vunpack.c.h.b16 %v425
        %v513 = vunpack.c.l.b16 %v426
        %v514 = vunpack.c.h.b16 %v426
        %v515 = vunpack.c.l.b16 %v427
        %v516 = vunpack.c.h.b16 %v427
        %v517 = vunpack.c.l.b16 %v428
        %v518 = vunpack.c.h.b16 %v428
        %v519 = vunpack.c.l.b16 %v429
        %v520 = vunpack.c.h.b16 %v429
        %v521 = vunpack.c.l.b16 %v430
        %v522 = vunpack.c.h.b16 %v430
        %v523 = vunpack.c.l.b16 %v431
        %v524 = vunpack.c.h.b16 %v431
        %v525 = vunpack.c.l.b16 %v432
        %v526 = vunpack.c.h.b16 %v432
        %v527 = vunpack.c.l.b16 %v433
        %v528 = vunpack.c.h.b16 %v433
        %v529 = vunpack.c.l.b16 %v434
        %v530 = vunpack.c.h.b16 %v434
        %v531 = vunpack.c.l.b16 %v435
        %v532 = vunpack.c.h.b16 %v435
        %v533 = vunpack.c.l.b16 %v436
        %v534 = vunpack.c.h.b16 %v436
        %v535 = vunpack.c.l.b16 %v437
        %v536 = vunpack.c.h.b16 %v437
        %v537 = vunpack.c.l.b16 %v438
        %v538 = vunpack.c.h.b16 %v438
        %v539 = vunpack.c.l.b16 %v439
        %v540 = vunpack.c.h.b16 %v439
        %v541 = vunpack.c.l.b16 %v440
        %v542 = vunpack.c.h.b16 %v440
        %v543 = vunpack.c.l.b16 %v441
        %v544 = vunpack.c.h.b16 %v441
        %v545 = vunpack.c.l.b16 %v442
        %v546 = vunpack.c.h.b16 %v442
        %v547 = vunpack.c.l.b16 %v443
        %v548 = vunpack.c.h.b16 %v443
        %v549 = vunpack.c.l.b16 %v444
        %v550 = vunpack.c.h.b16 %v444
        %v551 = vunpack.c.l.b16 %v445
        %v552 = vunpack.c.h.b16 %v445
        %v553 = vunpack.c.l.b16 %v446
        %v554 = vunpack.c.h.b16 %v446
        %v555 = vpack.c.b16 %v493, %v491
        %v556 = vpack.c.b16 %v494, %v492
        %v557 = vpack.c.b16 %v497, %v495
        %v558 = vpack.c.b16 %v498, %v496
        %v559 = vpack.c.b16 %v501, %v499
        %v560 = vpack.c.b16 %v502, %v500
        %v561 = vpack.c.b16 %v505, %v503
        %v562 = vpack.c.b16 %v506, %v504
        %v563 = vpack.c.b16 %v509, %v507
        %v564 = vpack.c.b16 %v510, %v508
        %v565 = vpack.c.b16 %v513, %v511
        %v566 = vpack.c.b16 %v514, %v512
        %v567 = vpack.c.b16 %v517, %v515
        %v568 = vpack.c.b16 %v518, %v516
        %v569 = vpack.c.b16 %v521, %v519
        %v570 = vpack.c.b16 %v522, %v520
        %v571 = vpack.c.b16 %v525, %v523
        %v572 = vpack.c.b16 %v526, %v524
        %v573 = vpack.c.b16 %v529, %v527
        %v574 = vpack.c.b16 %v530, %v528
        %v575 = vpack.c.b16 %v533, %v531
        %v576 = vpack.c.b16 %v534, %v532
        %v577 = vpack.c.b16 %v537, %v535
        %v578 = vpack.c.b16 %v538, %v536
        %v579 = vpack.c.b16 %v541, %v539
        %v580 = vpack.c.b16 %v542, %v540
        %v581 = vpack.c.b16 %v545, %v543
        %v582 = vpack.c.b16 %v546, %v544
        %v583 = vpack.c.b16 %v549, %v547
        %v584 = vpack.c.b16 %v550, %v548
        %v585 = vpack.c.b16 %v553, %v551
        %v586 = vpack.c.b16 %v554, %v552
        %619 = vmatprep.subr.bf16.mxu0 %v556
        %620 = vmatpush1.bf16.msra.mxu0 %v555
        %621 = vmatprep.subr.bf16.mxu0 %v558
        %622 = vmatpush1.bf16.msra.mxu0 %v557
        %623 = vmatprep.subr.bf16.mxu0 %v560
        %624 = vmatpush1.bf16.msra.mxu0 %v559
        %625 = vmatprep.subr.bf16.mxu0 %v562
        %626 = vmatpush1.bf16.msra.mxu0 %v561
        %627 = vmatprep.subr.bf16.mxu0 %v564
        %628 = vmatpush1.bf16.msra.mxu0 %v563
        %629 = vmatprep.subr.bf16.mxu0 %v566
        %630 = vmatpush1.bf16.msra.mxu0 %v565
        %631 = vmatprep.subr.bf16.mxu0 %v568
        %632 = vmatpush1.bf16.msra.mxu0 %v567
        %633 = vmatprep.subr.bf16.mxu0 %v570
        %634 = vmatpush1.bf16.msra.mxu0 %v569
        %635 = vmatprep.subr.bf16.mxu0 %v572
        %636 = vmatpush1.bf16.msra.mxu0 %v571
        %637 = vmatprep.subr.bf16.mxu0 %v574
        %638 = vmatpush1.bf16.msra.mxu0 %v573
        %639 = vmatprep.subr.bf16.mxu0 %v576
        %640 = vmatpush1.bf16.msra.mxu0 %v575
        %641 = vmatprep.subr.bf16.mxu0 %v578
        %642 = vmatpush1.bf16.msra.mxu0 %v577
        %643 = vmatprep.subr.bf16.mxu0 %v580
        %644 = vmatpush1.bf16.msra.mxu0 %v579
        %645 = vmatprep.subr.bf16.mxu0 %v582
        %646 = vmatpush1.bf16.msra.mxu0 %v581
        %647 = vmatprep.subr.bf16.mxu0 %v584
        %648 = vmatpush1.bf16.msra.mxu0 %v583
        %649 = vmatprep.subr.bf16.mxu0 %v586
        %650 = vmatpush1.bf16.msra.mxu0 %v585
        %651 = vmatprep.mubr.bf16.mxu0 %v412
        %652 = vmatmul.mubr.bf16.gmra.mrb[0].mxu0 %v411
        %v653 = vpop.f32.mrb[0].mxu0
        %v654 = vadd.f32 %v452, %v653
        %v655 = vpop.f32.mrb[0].mxu0
        %v656 = vadd.f32 %v456, %v655
        %v657 = vpop.f32.mrb[0].mxu0
        %v658 = vadd.f32 %v452, %v657
        %v659 = vpop.f32.mrb[0].mxu0
        %v660 = vadd.f32 %v456, %v659
        %661 = vmatprep.mubr.bf16.mxu0 %v414
        %662 = vmatmul.mubr.bf16.gmra.mrb[0].mxu0 %v413
        %v663 = vpop.f32.mrb[0].mxu0
        %v664 = vadd.f32 %v452, %v663
        %v665 = vpop.f32.mrb[0].mxu0
        %v666 = vadd.f32 %v456, %v665
        %v667 = vpop.f32.mrb[0].mxu0
        %v668 = vadd.f32 %v452, %v667
        %v669 = vpop.f32.mrb[0].mxu0
        %v670 = vadd.f32 %v456, %v669
        %671 = vdwg.mxu0
        %v672 = vmax.f32 %v654, 0.0
        %v673 = vmax.f32 %v656, 0.0
        %v674 = vmax.f32 %v658, 0.0
        %v675 = vmax.f32 %v660, 0.0
        %v676 = vmax.f32 %v664, 0.0
        %v677 = vmax.f32 %v666, 0.0
        %v678 = vmax.f32 %v668, 0.0
        %v679 = vmax.f32 %v670, 0.0
        %v680 = vld [vmem:[%s5] sm:$0x3]
        %v682 = vlaneseq
        %v683 = vshrl.u32 %v682, 7
        %v684 = vsub.s32 0, %v683
        %v685 = vrot.slane %v680, %v684
        %v686 = vlaneseq
        %v687 = vshrl.u32 %v686, 7
        %v688 = vsub.s32 1, %v687
        %v689 = vrot.slane %v680, %v688
        %v692 = vmul.f32 %v672, %v685
        %v693 = vmul.f32 %v673, %v689
        %v694 = vmul.f32 %v674, %v685
        %v695 = vmul.f32 %v675, %v689
        %v696 = vmul.f32 %v676, %v685
        %v697 = vmul.f32 %v677, %v689
        %v698 = vmul.f32 %v678, %v685
        %v699 = vmul.f32 %v679, %v689
        %v700 = vadd.f32 %v692, %v693
        %701 = vadd.xlane.f32.xlu0 %v700
        %v702 = vpop.xlane.xlu0 %701
        %v703 = vadd.f32 %v694, %v695
        %704 = vadd.xlane.f32.xlu0 %v703
        %v705 = vpop.xlane.xlu0 %704
        %v706 = vadd.f32 %v696, %v697
        %707 = vadd.xlane.f32.xlu0 %v706
        %v708 = vpop.xlane.xlu0 %707
        %v709 = vadd.f32 %v698, %v699
        %710 = vadd.xlane.f32.xlu0 %v709
        %v711 = vpop.xlane.xlu0 %710
        %v712 = vld [vmem:[#allocation2] sm:$0x1]
        %v714 = vlaneseq
        %v715 = vshrl.u32 %v714, 7
        %v716 = vsub.s32 0, %v715
        %v717 = vrot.slane %v712, %v716
        %v719 = vadd.f32 %v702, %v717
        %v720 = vadd.f32 %v705, %v717
        %v721 = vadd.f32 %v708, %v717
        %v722 = vadd.f32 %v711, %v717
        %vm723 = vcmask 7168
        %724 = vst.msk [vmem:[%s297] sm:$0xff] %vm723, %v719
        %725 = vst.msk [vmem:[%s297 + $0x8] sm:$0xff] %vm723, %v720
        %726 = vst.msk [vmem:[%s297 + $0x10] sm:$0xff] %vm723, %v721
        %727 = vst.msk [vmem:[%s297 + $0x18] sm:$0xff] %vm723, %v722
        %s728 = smul.u32 4, %s21
        %p729 = scmp.lt.s32.totalorder %s728, 7
        %s730 = scalar_select %p729, %s728, 7
        %s731 = smul.addr %s730, 8
        %s732 = scalar_lea.vmem %s7, %s731
        // Predicated region
        $region53: #{tpu_custom_call.1} parent=47 // pred_check
          %p733 = pneg %p191
        $region54: #{tpu_custom_call.1} parent=47 // pred_check_branch
          %735 = sbr.rel (%p733) target = $region56
        $region55: #{tpu_custom_call.1} parent=47 // pred_region
          %s736 = smul.u32 4, %s21
        $region56: #{tpu_custom_call.1} parent=47 // pred_fallthru
          _
      $region48: #{tpu_custom_call.1} parent=5 // pred_fallthru
        _
      %p737 = scmp.le.s32.totalorder 2, %s16
      // Predicated region
      $region57: #{tpu_custom_call.1} parent=5 // pred_check
        %p738 = pneg %p737
      $region58: #{tpu_custom_call.1} parent=5 // pred_check_branch
        %740 = sbr.rel (%p738) target = $region60
      $region59: #{tpu_custom_call.1} parent=5 // pred_region
        %s741 = ssub.s32 %s16, 2
        // Predicated region
        $region61: #{tpu_custom_call.1} parent=59 // pred_check
          %p742 = pneg %p197
        $region62: #{tpu_custom_call.1} parent=59 // pred_check_branch
          %744 = sbr.rel (%p742) target = $region64
        $region63: #{tpu_custom_call.1} parent=59 // pred_region
          %s745 = smul.u32 4, %s22
          %p746 = scmp.lt.s32.totalorder %s745, 7
          %s747 = scalar_select %p746, %s745, 7
          %s748 = smul.addr %s747, 8
          %s749 = scalar_lea.vmem %s7, %s748
        $region64: #{tpu_custom_call.1} parent=59 // pred_fallthru
          _
      $region60: #{tpu_custom_call.1} parent=5 // pred_fallthru
        _
    $region6: #{tpu_custom_call.1} parent=1 // loop_footer
      %s20 = sadd.s32 1, %s16
    $region7: #{tpu_custom_call.1} parent=1 // loop_footer_branch
      %15 = sbr.rel target = $region3
    $region8: #{tpu_custom_call.1} parent=1 // loop_exit
      _
    %750 = vsyncpa [#allocation4], 1
    %s751 = scalar_lea.sflag [#allocation4], 1
    %752 = vsyncpa %s751, 1

</llo_original>
